<compile_context>
chip_gen: v5e
topology: v5e:2x2
jax: 0.10.0
libtpu: 0.0.40
codegen_flags: <defaults>
</compile_context>

<pallas_src>
import functools

import jax
import jax.numpy as jnp
from jax import lax
from jax.experimental import pallas as pl
from jax.experimental.pallas import tpu as pltpu


def _round_up(n: int, m: int) -> int:
    return ((n + m - 1) // m) * m


def _dynk_kernel(x_ref, mask_ref, out_ref, *, tau: float, apply_softmax: bool):
    # Block layout: (E, TM) with tokens on the 128-wide lane axis.
    x = x_ref[...]
    e, tm = x.shape
    shares = x.astype(jnp.float32)

    if apply_softmax:
        # Fused row-wise softmax over the expert (sublane) axis.
        shares = shares - jnp.max(shares, axis=0, keepdims=True)
        shares = jnp.exp(shares)
        shares = shares / jnp.sum(shares, axis=0, keepdims=True)

    # prefix[i] = sum of shares strictly ahead of expert i in a stable descending
    # sort. Statically unrolled loop over experts: per iteration one sublane
    # broadcast + compare + select + add on lane-dense (E, TM) tiles; no
    # (E, E, TM) temporary is ever materialized.
    i_idx = lax.broadcasted_iota(jnp.int32, (e, tm), 0)
    prefix = jnp.zeros((e, tm), jnp.float32)
    for j in range(e):
        sj = shares[j:j + 1, :]                                # (1, TM), sublane bcast
        ahead = (sj > shares) | ((sj == shares) & (i_idx > j))
        prefix = prefix + jnp.where(ahead, sj, jnp.float32(0.0))

    keep = prefix < jnp.float32(tau)                           # rank-0 expert always kept
    mask_ref[...] = keep.astype(mask_ref.dtype)
    if apply_softmax:
        out_ref[...] = jnp.where(keep, shares, 0.0).astype(out_ref.dtype)
    else:
        out_ref[...] = jnp.where(keep, x, jnp.zeros_like(x))


def dynamic_k_gating(routing_tensor: jax.Array, num_experts: int, tau: float | None = None, *,
                     token_tile: int = 512, mask_dtype=jnp.int32, apply_softmax: bool = False):
    """DynamicKGating.forward: returns (expert_mask, masked_routing), shaped like input.

    If apply_softmax=True, `routing_tensor` is interpreted as logits and the softmax
    is fused into the kernel (saves one HBM read+write of the routing tensor).
    mask_dtype=jnp.int8 cuts output HBM traffic (largest win on v5e).
    """
    if tau is None:
        tau = 1.0 / num_experts
    assert 0.0 < tau <= 1.0
    assert token_tile > 0 and token_tile % 128 == 0, "token_tile must be a multiple of 128 (lane width)"

    orig_shape = routing_tensor.shape
    assert orig_shape[-1] == num_experts
    x = routing_tensor.reshape(-1, num_experts)
    n_tok, e = x.shape
    out_dtype = x.dtype

    # Clamp the tile for tiny inputs, then pad the token axis to a tile multiple.
    tm = min(token_tile, _round_up(max(n_tok, 1), 128))
    padded = _round_up(max(n_tok, 1), tm)
    if padded != n_tok:
        x = jnp.pad(x, ((0, padded - n_tok), (0, 0)))

    # Layout plumbing: tokens on lanes -> (E, padded). The kernel then sees fully
    # lane-dense (E, TM) blocks and emits unmasked full-width stores.
    xt = x.T

    kernel = functools.partial(_dynk_kernel, tau=float(tau), apply_softmax=apply_softmax)

    # Explicit VMEM budget: double-buffered in/out blocks plus headroom, capped so
    # the same tiling is safe on v7x's 64 MiB/TC VMEM (v5e default scope is 16 MiB).
    block_bytes = e * tm * (xt.dtype.itemsize
                            + jnp.dtype(out_dtype).itemsize
                            + jnp.dtype(mask_dtype).itemsize)
    vmem_limit = int(min(max(6 * block_bytes, 16 << 20), 48 << 20))

    grid = (padded // tm,)  # "parallel" axis: keep it multi-step so v7x's 2 TCs both get work
    mask_t, masked_t = pl.pallas_call(
        kernel,
        out_shape=(
            jax.ShapeDtypeStruct((e, padded), mask_dtype),
            jax.ShapeDtypeStruct((e, padded), out_dtype),
        ),
        grid=grid,
        in_specs=[pl.BlockSpec((e, tm), lambda i: (0, i))],
        out_specs=(
            pl.BlockSpec((e, tm), lambda i: (0, i)),
            pl.BlockSpec((e, tm), lambda i: (0, i)),
        ),
        compiler_params=pltpu.CompilerParams(
            dimension_semantics=("parallel",),
            vmem_limit_bytes=vmem_limit,
        ),
    )(xt)

    mask = mask_t.T[:n_tok].reshape(orig_shape)
    masked = masked_t.T[:n_tok].reshape(orig_shape)
    return mask, masked


def _reference(x, tau):
    # Direct transcription of DynamicKGating.dynk_mask (pure JAX).
    order = jnp.argsort(-x, axis=-1, stable=True)
    sorted_x = jnp.take_along_axis(x, order, axis=-1)
    csum = jnp.cumsum(sorted_x, axis=-1)
    cmask = csum < tau
    cmask = jnp.concatenate([jnp.ones_like(cmask[..., :1]), cmask[..., :-1]], axis=-1)
    inv = jnp.argsort(order, axis=-1, stable=True)
    mask = jnp.take_along_axis(cmask, inv, axis=-1).astype(jnp.int32)
    return mask, x * mask


if __name__ == "__main__":
    num_experts = 8
    batch, seq = 2, 8                       # 16 tokens total
    tau = 1.0 / num_experts                 # default tau in __init__

    key = jax.random.PRNGKey(0)
    logits = jax.random.normal(key, (batch, seq, num_experts), dtype=jnp.float32)
    routing = jax.nn.softmax(logits, axis=-1)   # expert shares per token

    ref_mask, ref_masked = _reference(routing, tau)

    # Path A: module semantics — caller passes routing shares.
    mask, masked_routing = dynamic_k_gating(routing, num_experts, tau)
    jax.block_until_ready((mask, masked_routing))
    assert mask.shape == routing.shape and mask.dtype == jnp.int32
    assert jnp.array_equal(mask, ref_mask)
    assert jnp.allclose(masked_routing, ref_masked, atol=1e-6)

    # Path B: fused-softmax variant — caller passes logits, kernel computes the
    # shares in-kernel (one fewer HBM round trip of the routing tensor).
    mask_b, masked_b = dynamic_k_gating(logits, num_experts, tau, apply_softmax=True)
    jax.block_until_ready((mask_b, masked_b))
    assert jnp.array_equal(mask_b, ref_mask)
    assert jnp.allclose(masked_b, ref_masked, atol=1e-5)

    print("KERNEL_OK")
</pallas_src>

<mosaic_0001>
module attributes {stable_mosaic.version = 11 : i64} {
  func.func @_dynk_kernel(%arg0: i32, %arg1: memref<8x128xf32, #tpu.memory_space<vmem>>, %arg2: memref<8x128xi32, #tpu.memory_space<vmem>>, %arg3: memref<8x128xf32, #tpu.memory_space<vmem>>) attributes {dimension_semantics = [#tpu.dimension_semantics<parallel>], iteration_bounds = array<i64: 1>, scalar_prefetch = 0 : i64, scratch_operands = 0 : i64, tpu.core_type = #tpu.core_type<tc>, window_params = [{transform_indices = @transform_0, window_bounds = array<i64: 8, 128>}, {transform_indices = @transform_1, window_bounds = array<i64: 8, 128>}, {transform_indices = @transform_2, window_bounds = array<i64: 8, 128>}]} {
    %c0 = arith.constant 0 : index
    %c0_0 = arith.constant 0 : index
    %0 = vector.load %arg1[%c0, %c0_0] : memref<8x128xf32, #tpu.memory_space<vmem>>, vector<8x128xf32>
    %1 = tpu.iota {dimensions = array<i32: 0>} : vector<8x128xi32>
    %cst = arith.constant 0.000000e+00 : f32
    %2 = vector.broadcast %cst : f32 to vector<8x128xf32>
    %3 = vector.extract_strided_slice %0 {offsets = [0, 0], sizes = [1, 128], strides = [1, 1]} : vector<8x128xf32> to vector<1x128xf32>
    %4 = vector.broadcast %3 : vector<1x128xf32> to vector<8x128xf32>
    %5 = arith.cmpf ogt, %4, %0 : vector<8x128xf32>
    %6 = vector.broadcast %3 : vector<1x128xf32> to vector<8x128xf32>
    %7 = arith.cmpf oeq, %6, %0 : vector<8x128xf32>
    %c0_i32 = arith.constant 0 : i32
    %8 = vector.broadcast %c0_i32 : i32 to vector<8x128xi32>
    %9 = arith.cmpi sgt, %1, %8 : vector<8x128xi32>
    %10 = arith.andi %7, %9 : vector<8x128xi1>
    %11 = arith.ori %5, %10 : vector<8x128xi1>
    %cst_1 = arith.constant 0.000000e+00 : f32
    %12 = vector.shape_cast %3 : vector<1x128xf32> to vector<1x128xf32>
    %13 = vector.broadcast %12 : vector<1x128xf32> to vector<8x128xf32>
    %14 = vector.broadcast %cst_1 : f32 to vector<8x128xf32>
    %15 = arith.select %11, %13, %14 : vector<8x128xi1>, vector<8x128xf32>
    %16 = arith.addf %2, %15 : vector<8x128xf32>
    %17 = vector.extract_strided_slice %0 {offsets = [1, 0], sizes = [1, 128], strides = [1, 1]} : vector<8x128xf32> to vector<1x128xf32>
    %18 = vector.broadcast %17 : vector<1x128xf32> to vector<8x128xf32>
    %19 = arith.cmpf ogt, %18, %0 : vector<8x128xf32>
    %20 = vector.broadcast %17 : vector<1x128xf32> to vector<8x128xf32>
    %21 = arith.cmpf oeq, %20, %0 : vector<8x128xf32>
    %c1_i32 = arith.constant 1 : i32
    %22 = vector.broadcast %c1_i32 : i32 to vector<8x128xi32>
    %23 = arith.cmpi sgt, %1, %22 : vector<8x128xi32>
    %24 = arith.andi %21, %23 : vector<8x128xi1>
    %25 = arith.ori %19, %24 : vector<8x128xi1>
    %cst_2 = arith.constant 0.000000e+00 : f32
    %26 = vector.shape_cast %17 : vector<1x128xf32> to vector<1x128xf32>
    %27 = vector.broadcast %26 : vector<1x128xf32> to vector<8x128xf32>
    %28 = vector.broadcast %cst_2 : f32 to vector<8x128xf32>
    %29 = arith.select %25, %27, %28 : vector<8x128xi1>, vector<8x128xf32>
    %30 = arith.addf %16, %29 : vector<8x128xf32>
    %31 = vector.extract_strided_slice %0 {offsets = [2, 0], sizes = [1, 128], strides = [1, 1]} : vector<8x128xf32> to vector<1x128xf32>
    %32 = vector.broadcast %31 : vector<1x128xf32> to vector<8x128xf32>
    %33 = arith.cmpf ogt, %32, %0 : vector<8x128xf32>
    %34 = vector.broadcast %31 : vector<1x128xf32> to vector<8x128xf32>
    %35 = arith.cmpf oeq, %34, %0 : vector<8x128xf32>
    %c2_i32 = arith.constant 2 : i32
    %36 = vector.broadcast %c2_i32 : i32 to vector<8x128xi32>
    %37 = arith.cmpi sgt, %1, %36 : vector<8x128xi32>
    %38 = arith.andi %35, %37 : vector<8x128xi1>
    %39 = arith.ori %33, %38 : vector<8x128xi1>
    %cst_3 = arith.constant 0.000000e+00 : f32
    %40 = vector.shape_cast %31 : vector<1x128xf32> to vector<1x128xf32>
    %41 = vector.broadcast %40 : vector<1x128xf32> to vector<8x128xf32>
    %42 = vector.broadcast %cst_3 : f32 to vector<8x128xf32>
    %43 = arith.select %39, %41, %42 : vector<8x128xi1>, vector<8x128xf32>
    %44 = arith.addf %30, %43 : vector<8x128xf32>
    %45 = vector.extract_strided_slice %0 {offsets = [3, 0], sizes = [1, 128], strides = [1, 1]} : vector<8x128xf32> to vector<1x128xf32>
    %46 = vector.broadcast %45 : vector<1x128xf32> to vector<8x128xf32>
    %47 = arith.cmpf ogt, %46, %0 : vector<8x128xf32>
    %48 = vector.broadcast %45 : vector<1x128xf32> to vector<8x128xf32>
    %49 = arith.cmpf oeq, %48, %0 : vector<8x128xf32>
    %c3_i32 = arith.constant 3 : i32
    %50 = vector.broadcast %c3_i32 : i32 to vector<8x128xi32>
    %51 = arith.cmpi sgt, %1, %50 : vector<8x128xi32>
    %52 = arith.andi %49, %51 : vector<8x128xi1>
    %53 = arith.ori %47, %52 : vector<8x128xi1>
    %cst_4 = arith.constant 0.000000e+00 : f32
    %54 = vector.shape_cast %45 : vector<1x128xf32> to vector<1x128xf32>
    %55 = vector.broadcast %54 : vector<1x128xf32> to vector<8x128xf32>
    %56 = vector.broadcast %cst_4 : f32 to vector<8x128xf32>
    %57 = arith.select %53, %55, %56 : vector<8x128xi1>, vector<8x128xf32>
    %58 = arith.addf %44, %57 : vector<8x128xf32>
    %59 = vector.extract_strided_slice %0 {offsets = [4, 0], sizes = [1, 128], strides = [1, 1]} : vector<8x128xf32> to vector<1x128xf32>
    %60 = vector.broadcast %59 : vector<1x128xf32> to vector<8x128xf32>
    %61 = arith.cmpf ogt, %60, %0 : vector<8x128xf32>
    %62 = vector.broadcast %59 : vector<1x128xf32> to vector<8x128xf32>
    %63 = arith.cmpf oeq, %62, %0 : vector<8x128xf32>
    %c4_i32 = arith.constant 4 : i32
    %64 = vector.broadcast %c4_i32 : i32 to vector<8x128xi32>
    %65 = arith.cmpi sgt, %1, %64 : vector<8x128xi32>
    %66 = arith.andi %63, %65 : vector<8x128xi1>
    %67 = arith.ori %61, %66 : vector<8x128xi1>
    %cst_5 = arith.constant 0.000000e+00 : f32
    %68 = vector.shape_cast %59 : vector<1x128xf32> to vector<1x128xf32>
    %69 = vector.broadcast %68 : vector<1x128xf32> to vector<8x128xf32>
    %70 = vector.broadcast %cst_5 : f32 to vector<8x128xf32>
    %71 = arith.select %67, %69, %70 : vector<8x128xi1>, vector<8x128xf32>
    %72 = arith.addf %58, %71 : vector<8x128xf32>
    %73 = vector.extract_strided_slice %0 {offsets = [5, 0], sizes = [1, 128], strides = [1, 1]} : vector<8x128xf32> to vector<1x128xf32>
    %74 = vector.broadcast %73 : vector<1x128xf32> to vector<8x128xf32>
    %75 = arith.cmpf ogt, %74, %0 : vector<8x128xf32>
    %76 = vector.broadcast %73 : vector<1x128xf32> to vector<8x128xf32>
    %77 = arith.cmpf oeq, %76, %0 : vector<8x128xf32>
    %c5_i32 = arith.constant 5 : i32
    %78 = vector.broadcast %c5_i32 : i32 to vector<8x128xi32>
    %79 = arith.cmpi sgt, %1, %78 : vector<8x128xi32>
    %80 = arith.andi %77, %79 : vector<8x128xi1>
    %81 = arith.ori %75, %80 : vector<8x128xi1>
    %cst_6 = arith.constant 0.000000e+00 : f32
    %82 = vector.shape_cast %73 : vector<1x128xf32> to vector<1x128xf32>
    %83 = vector.broadcast %82 : vector<1x128xf32> to vector<8x128xf32>
    %84 = vector.broadcast %cst_6 : f32 to vector<8x128xf32>
    %85 = arith.select %81, %83, %84 : vector<8x128xi1>, vector<8x128xf32>
    %86 = arith.addf %72, %85 : vector<8x128xf32>
    %87 = vector.extract_strided_slice %0 {offsets = [6, 0], sizes = [1, 128], strides = [1, 1]} : vector<8x128xf32> to vector<1x128xf32>
    %88 = vector.broadcast %87 : vector<1x128xf32> to vector<8x128xf32>
    %89 = arith.cmpf ogt, %88, %0 : vector<8x128xf32>
    %90 = vector.broadcast %87 : vector<1x128xf32> to vector<8x128xf32>
    %91 = arith.cmpf oeq, %90, %0 : vector<8x128xf32>
    %c6_i32 = arith.constant 6 : i32
    %92 = vector.broadcast %c6_i32 : i32 to vector<8x128xi32>
    %93 = arith.cmpi sgt, %1, %92 : vector<8x128xi32>
    %94 = arith.andi %91, %93 : vector<8x128xi1>
    %95 = arith.ori %89, %94 : vector<8x128xi1>
    %cst_7 = arith.constant 0.000000e+00 : f32
    %96 = vector.shape_cast %87 : vector<1x128xf32> to vector<1x128xf32>
    %97 = vector.broadcast %96 : vector<1x128xf32> to vector<8x128xf32>
    %98 = vector.broadcast %cst_7 : f32 to vector<8x128xf32>
    %99 = arith.select %95, %97, %98 : vector<8x128xi1>, vector<8x128xf32>
    %100 = arith.addf %86, %99 : vector<8x128xf32>
    %101 = vector.extract_strided_slice %0 {offsets = [7, 0], sizes = [1, 128], strides = [1, 1]} : vector<8x128xf32> to vector<1x128xf32>
    %102 = vector.broadcast %101 : vector<1x128xf32> to vector<8x128xf32>
    %103 = arith.cmpf ogt, %102, %0 : vector<8x128xf32>
    %104 = vector.broadcast %101 : vector<1x128xf32> to vector<8x128xf32>
    %105 = arith.cmpf oeq, %104, %0 : vector<8x128xf32>
    %c7_i32 = arith.constant 7 : i32
    %106 = vector.broadcast %c7_i32 : i32 to vector<8x128xi32>
    %107 = arith.cmpi sgt, %1, %106 : vector<8x128xi32>
    %108 = arith.andi %105, %107 : vector<8x128xi1>
    %109 = arith.ori %103, %108 : vector<8x128xi1>
    %cst_8 = arith.constant 0.000000e+00 : f32
    %110 = vector.shape_cast %101 : vector<1x128xf32> to vector<1x128xf32>
    %111 = vector.broadcast %110 : vector<1x128xf32> to vector<8x128xf32>
    %112 = vector.broadcast %cst_8 : f32 to vector<8x128xf32>
    %113 = arith.select %109, %111, %112 : vector<8x128xi1>, vector<8x128xf32>
    %114 = arith.addf %100, %113 : vector<8x128xf32>
    %cst_9 = arith.constant 1.250000e-01 : f32
    %115 = vector.broadcast %cst_9 : f32 to vector<8x128xf32>
    %116 = arith.cmpf olt, %114, %115 : vector<8x128xf32>
    %117 = arith.extui %116 : vector<8x128xi1> to vector<8x128xi32>
    %c0_10 = arith.constant 0 : index
    %c0_11 = arith.constant 0 : index
    %118 = vector.load %arg2[%c0_10, %c0_11] : memref<8x128xi32, #tpu.memory_space<vmem>>, vector<8x128xi32>
    tpu.vector_store %arg2[%c0_10, %c0_11], %117 {strides = array<i32>} : memref<8x128xi32, #tpu.memory_space<vmem>>, vector<8x128xi32>,
    %cst_12 = arith.constant 0.000000e+00 : f32
    %119 = vector.broadcast %cst_12 : f32 to vector<8x128xf32>
    %120 = arith.select %116, %0, %119 : vector<8x128xi1>, vector<8x128xf32>
    %c0_13 = arith.constant 0 : index
    %c0_14 = arith.constant 0 : index
    %121 = vector.load %arg3[%c0_13, %c0_14] : memref<8x128xf32, #tpu.memory_space<vmem>>, vector<8x128xf32>
    tpu.vector_store %arg3[%c0_13, %c0_14], %120 {strides = array<i32>} : memref<8x128xf32, #tpu.memory_space<vmem>>, vector<8x128xf32>,
    return
  }
  func.func @transform_0(%arg0: i32) -> (i32, i32) {
    %c0_i32 = arith.constant 0 : i32
    %c0_i32_0 = arith.constant 0 : i32
    return %c0_i32, %arg0 : i32, i32
  }
  func.func @transform_1(%arg0: i32) -> (i32, i32) {
    %c0_i32 = arith.constant 0 : i32
    %c0_i32_0 = arith.constant 0 : i32
    return %c0_i32, %arg0 : i32, i32
  }
  func.func @transform_2(%arg0: i32) -> (i32, i32) {
    %c0_i32 = arith.constant 0 : i32
    %c0_i32_0 = arith.constant 0 : i32
    return %c0_i32, %arg0 : i32, i32
  }
}

</mosaic_0001>

<llo_original>
// kernel: tpu_custom_call.1
$region0: #{tpu_custom_call.1}
  #allocation0 [shape = 'u32[]', space=smem, size = 0x4, offset = 0x4, fixed_abs, tag = 'smem constant byte address 0x4 - core index']
  #allocation1 [shape = 'u32[72,128]{1,0:T(1,128)}', space=vmem, size = 0x9000, scoped, tag = 'internal scratch']
  %s0 = inlined_call_operand.hbm [shape: f32[8,128], index: 0, kind: input, shape index: {}]
  %s1 = inlined_call_operand.hbm [shape: s32[8,128], index: 1, kind: output, shape index: {0}]
  %s2 = inlined_call_operand.hbm [shape: f32[8,128], index: 2, kind: output, shape index: {1}]
  %3 = xla_tuple %s1, %s2
  %s4 = sld [smem:[#allocation0]]
  $region26: #{tpu_custom_call.1} parent=0
    _
  %s6 = ssub.s32 1, %s4
  %s7 = scalar_select 0, %s6, %s4
  $region1: #{tpu_custom_call.1} parent=0
    #allocation2 [shape = 'u8[4096]{0}', space=vmem, size = 0x1000, scoped, tag = 'input window, operand 0, single buffered']
    #allocation3 [shape = 's32[1]{0}', space=sflag, size = 0x4, scoped, tag = 'scoped memory for tpu_custom_call.1']
    #allocation4 [shape = 's32[1]{0}', space=sflag, size = 0x4, scoped, tag = 'scoped memory for tpu_custom_call.1']
    #allocation5 [shape = 'u8[4096]{0}', space=vmem, size = 0x1000, scoped, tag = 'output window, operand 0, single buffered']
    #allocation6 [shape = 'u8[4096]{0}', space=vmem, size = 0x1000, scoped, tag = 'output window, operand 1, single buffered']
    #allocation7 [shape = 's32[1]{0}', space=sflag, size = 0x4, scoped, tag = 'scoped memory for tpu_custom_call.1']
    %8 = vsyncpa [#allocation3], 0
    %9 = vsyncpa [#allocation4], 0
    %10 = vsyncpa [#allocation7], 0
    // Predicated region
    $region2: #{tpu_custom_call.1} parent=1 // pred_check
      _
    $region3: #{tpu_custom_call.1} parent=1 // pred_check_branch
      %12 = sbr.rel (0) target = $region5
    $region4: #{tpu_custom_call.1} parent=1 // pred_region
      %14 = vsyncadd [#allocation3], 0
      %s16 = sshll.u32 %s0, 4
      %s17 = int_to_ptr.hbm [resolvable:$true] %s16
      %s18 = sshll.u32 [#allocation2], 4
      %s19 = int_to_ptr.vmem [resolvable:$true] %s18
      %21 = dma.hbm_to_vmem [thread:$0]  %s17, 128, %s19, [#allocation3]
    $region5: #{tpu_custom_call.1} parent=1 // pred_fallthru
      _
    // Predicated region
    $region6: #{tpu_custom_call.1} parent=1 // pred_check
      _
    $region7: #{tpu_custom_call.1} parent=1 // pred_check_branch
      %23 = sbr.rel (0) target = $region9
    $region8: #{tpu_custom_call.1} parent=1 // pred_region
      %25 = dma.done [#allocation3], 128
    $region9: #{tpu_custom_call.1} parent=1 // pred_fallthru
      _
    %v26 = vld [vmem:[#allocation2] sm:$0xff]
    %v27 = vlaneseq
    %v28 = vshrl.u32 %v27, 7
    %v29 = vperm.slane %v26, 0
    %vm30 = vcmp.gt.f32.partialorder %v29, %v26
    %vm31 = vcmp.eq.f32.partialorder %v29, %v26
    %vm32 = vcmp.gt.s32.totalorder %v28, 0
    %vm33 = vmand %vm31, %vm32
    %vm34 = vmor %vm30, %vm33
    %v35 = vsel %vm34, %v29, 0.0
    %v36 = vadd.f32 %v35, 0.0
    %v37 = vperm.slane %v26, 1
    %vm38 = vcmp.gt.f32.partialorder %v37, %v26
    %vm39 = vcmp.eq.f32.partialorder %v37, %v26
    %vm40 = vcmp.gt.s32.totalorder %v28, 1
    %vm41 = vmand %vm39, %vm40
    %vm42 = vmor %vm38, %vm41
    %v43 = vsel %vm42, %v37, 0.0
    %v44 = vadd.f32 %v36, %v43
    %v45 = vperm.slane %v26, 2
    %vm46 = vcmp.gt.f32.partialorder %v45, %v26
    %vm47 = vcmp.eq.f32.partialorder %v45, %v26
    %vm48 = vcmp.gt.s32.totalorder %v28, 2
    %vm49 = vmand %vm47, %vm48
    %vm50 = vmor %vm46, %vm49
    %v51 = vsel %vm50, %v45, 0.0
    %v52 = vadd.f32 %v44, %v51
    %v53 = vperm.slane %v26, 3
    %vm54 = vcmp.gt.f32.partialorder %v53, %v26
    %vm55 = vcmp.eq.f32.partialorder %v53, %v26
    %vm56 = vcmp.gt.s32.totalorder %v28, 3
    %vm57 = vmand %vm55, %vm56
    %vm58 = vmor %vm54, %vm57
    %v59 = vsel %vm58, %v53, 0.0
    %v60 = vadd.f32 %v52, %v59
    %v61 = vperm.slane %v26, 4
    %vm62 = vcmp.gt.f32.partialorder %v61, %v26
    %vm63 = vcmp.eq.f32.partialorder %v61, %v26
    %vm64 = vcmp.gt.s32.totalorder %v28, 4
    %vm65 = vmand %vm63, %vm64
    %vm66 = vmor %vm62, %vm65
    %v67 = vsel %vm66, %v61, 0.0
    %v68 = vadd.f32 %v60, %v67
    %v69 = vperm.slane %v26, 5
    %vm70 = vcmp.gt.f32.partialorder %v69, %v26
    %vm71 = vcmp.eq.f32.partialorder %v69, %v26
    %vm72 = vcmp.gt.s32.totalorder %v28, 5
    %vm73 = vmand %vm71, %vm72
    %vm74 = vmor %vm70, %vm73
    %v75 = vsel %vm74, %v69, 0.0
    %v76 = vadd.f32 %v68, %v75
    %v77 = vperm.slane %v26, 6
    %vm78 = vcmp.gt.f32.partialorder %v77, %v26
    %vm79 = vcmp.eq.f32.partialorder %v77, %v26
    %vm80 = vcmp.gt.s32.totalorder %v28, 6
    %vm81 = vmand %vm79, %vm80
    %vm82 = vmor %vm78, %vm81
    %v83 = vsel %vm82, %v77, 0.0
    %v84 = vadd.f32 %v76, %v83
    %v85 = vperm.slane %v26, 7
    %vm86 = vcmp.gt.f32.partialorder %v85, %v26
    %vm87 = vcmp.eq.f32.partialorder %v85, %v26
    %vm88 = vcmp.gt.s32.totalorder %v28, 7
    %vm89 = vmand %vm87, %vm88
    %vm90 = vmor %vm86, %vm89
    %v91 = vsel %vm90, %v85, 0.0
    %v92 = vadd.f32 %v84, %v91
    %vm93 = vcmp.lt.f32.partialorder %v92, 0.125
    %v94 = vsel %vm93, 1, 0
    %95 = vst [vmem:[#allocation5] sm:$0xff] %v94
    %v96 = vsel %vm93, %v26, 0.0
    %97 = vst [vmem:[#allocation6] sm:$0xff] %v96
    // Predicated region
    $region10: #{tpu_custom_call.1} parent=1 // pred_check
      _
    $region11: #{tpu_custom_call.1} parent=1 // pred_check_branch
      %99 = sbr.rel (0) target = $region13
    $region12: #{tpu_custom_call.1} parent=1 // pred_region
      %101 = vsyncadd [#allocation4], 0
      %s103 = sshll.u32 [#allocation5], 4
      %s104 = int_to_ptr.vmem [resolvable:$true] %s103
      %s105 = sshll.u32 %s1, 4
      %s106 = int_to_ptr.hbm [resolvable:$true] %s105
      %108 = dma.vmem_to_hbm [thread:$0]  %s104, 128, %s106, [#allocation4]
    $region13: #{tpu_custom_call.1} parent=1 // pred_fallthru
      _
    // Predicated region
    $region14: #{tpu_custom_call.1} parent=1 // pred_check
      _
    $region15: #{tpu_custom_call.1} parent=1 // pred_check_branch
      %110 = sbr.rel (0) target = $region17
    $region16: #{tpu_custom_call.1} parent=1 // pred_region
      %112 = vsyncadd [#allocation7], 0
      %s114 = sshll.u32 [#allocation6], 4
      %s115 = int_to_ptr.vmem [resolvable:$true] %s114
      %s116 = sshll.u32 %s2, 4
      %s117 = int_to_ptr.hbm [resolvable:$true] %s116
      %119 = dma.vmem_to_hbm [thread:$0]  %s115, 128, %s117, [#allocation7]
    $region17: #{tpu_custom_call.1} parent=1 // pred_fallthru
      _
    // Predicated region
    $region18: #{tpu_custom_call.1} parent=1 // pred_check
      _
    $region19: #{tpu_custom_call.1} parent=1 // pred_check_branch
      %121 = sbr.rel (0) target = $region21
    $region20: #{tpu_custom_call.1} parent=1 // pred_region
      %123 = dma.done [#allocation4], 128
    $region21: #{tpu_custom_call.1} parent=1 // pred_fallthru
      _
    // Predicated region
    $region22: #{tpu_custom_call.1} parent=1 // pred_check
      _
    $region23: #{tpu_custom_call.1} parent=1 // pred_check_branch
      %125 = sbr.rel (0) target = $region25
    $region24: #{tpu_custom_call.1} parent=1 // pred_region
      %127 = dma.done [#allocation7], 128
    $region25: #{tpu_custom_call.1} parent=1 // pred_fallthru
      _
    %128 = vsyncpa [#allocation3], 1
    %129 = vsyncpa [#allocation4], 1
    %130 = vsyncpa [#allocation7], 1

</llo_original>
